<compile_context>
chip_gen: v6e
topology: v6e:2x2x1
jax: 0.10.0
libtpu: 0.0.40
codegen_flags: <defaults>
</compile_context>

<pallas_src>
import jax
import jax.numpy as jnp
from jax import lax
from jax.experimental import pallas as pl
from jax.experimental.pallas import tpu as pltpu


def rnn_fc_kernel(xp_ref, whh_ref, wfc_ref, bfc_ref, out_ref, h_scratch):
    """One grid step processes `chunk` timesteps of the tanh recurrence.

    xp_ref : [chunk, batch, hidden]  precomputed x_t @ W_ih^T + (b_ih + b_hh)
    whh_ref: [hidden, hidden]        (W_hh^T)
    wfc_ref: [hidden, output_dim]    (W_fc^T)
    bfc_ref: [1, output_dim]
    out_ref: [batch, output_dim]     written only on the final grid step
    h_scratch: [batch, hidden] f32 VMEM scratch; the RNN carry across grid steps.
    """
    c = pl.program_id(0)
    chunk = xp_ref.shape[0]

    # h_0 = 0 (PyTorch default when no initial hidden state is given)
    @pl.when(c == 0)
    def _():
        h_scratch[...] = jnp.zeros_like(h_scratch)

    # Hoist the recurrent weight load out of the unrolled loop.
    whh = whh_ref[...]

    def step(t, h):
        # Serial critical path per timestep: one [B,H]@[H,H] matmul + tanh.
        return jnp.tanh(
            xp_ref[t]
            + jnp.dot(h, whh, preferred_element_type=jnp.float32)
        )

    # Carry h in registers; fully unroll (chunk is static) for LLO visibility.
    h = lax.fori_loop(0, chunk, step, h_scratch[...], unroll=True)
    h_scratch[...] = h

    # fc(hidden.squeeze(0)) on the last chunk only.
    @pl.when(c == pl.num_programs(0) - 1)
    def _():
        out_ref[...] = (
            jnp.dot(h, wfc_ref[...], preferred_element_type=jnp.float32)
            + bfc_ref[...]
        )


def rnn_forward(text, params, *, seq_chunk=None):
    """text: int32 [seq_len, batch]; returns f32 [batch, output_dim]."""
    emb_table, w_ih_t, w_hh_t, b_ih, b_hh, w_fc_t, b_fc = params
    seq_len, batch = text.shape
    emb_dim = emb_table.shape[1]
    hidden = w_hh_t.shape[0]
    out_dim = w_fc_t.shape[1]

    # Embedding gather + hoisted (non-recurrent) input projection, fused by
    # XLA into one [S*B, E] @ [E, H] matmul with the pre-summed RNN biases
    # folded in.  Only x_proj ([S, B, H]) is streamed into the kernel.
    # TODO(synk): for large vocab/seq, fuse the gather into the kernel via
    # PrefetchScalarGridSpec (token ids as scalar prefetch driving a row-gather
    # index_map) to avoid materializing the activation stream in HBM twice.
    embedded = jnp.take(emb_table, text, axis=0)                    # [S, B, E]
    fused_bias = b_ih + b_hh                                        # [1, H]
    x_proj = (
        embedded.reshape(seq_len * batch, emb_dim) @ w_ih_t + fused_bias
    ).reshape(seq_len, batch, hidden)                               # [S, B, H]

    # Chunk the sequence so x_proj is streamed (double-buffered) through VMEM
    # instead of loaded monolithically; the hidden state persists in scratch.
    if seq_chunk is None:
        seq_chunk = min(seq_len, 128)
    while seq_len % seq_chunk != 0:   # keep it a divisor of seq_len
        seq_chunk -= 1
    num_chunks = seq_len // seq_chunk

    # NOTE: on v6e/v7x, casting x_proj / W_hh to bfloat16 (keeping the f32
    # accumulate via preferred_element_type) doubles MXU rate; kept f32 here
    # to match the PyTorch module's precision exactly.
    out = pl.pallas_call(
        rnn_fc_kernel,
        out_shape=jax.ShapeDtypeStruct((batch, out_dim), jnp.float32),
        grid_spec=pltpu.PrefetchScalarGridSpec(
            num_scalar_prefetch=0,
            grid=(num_chunks,),
            in_specs=[
                pl.BlockSpec((seq_chunk, batch, hidden), lambda c: (c, 0, 0)),
                pl.BlockSpec((hidden, hidden), lambda c: (0, 0)),
                pl.BlockSpec((hidden, out_dim), lambda c: (0, 0)),
                pl.BlockSpec((1, out_dim), lambda c: (0, 0)),
            ],
            out_specs=pl.BlockSpec((batch, out_dim), lambda c: (0, 0)),
            scratch_shapes=[pltpu.VMEM((batch, hidden), jnp.float32)],
        ),
        compiler_params=pltpu.CompilerParams(
            dimension_semantics=("arbitrary",),   # sequential recurrence axis
        ),
    )(x_proj, w_hh_t, w_fc_t, b_fc)
    return out


def init_params(key, input_dim, embedding_dim, hidden_dim, output_dim):
    ks = jax.random.split(key, 7)
    emb_table = jax.random.normal(ks[0], (input_dim, embedding_dim), jnp.float32)
    # PyTorch stores weight_ih as [hidden, emb]; we keep the transpose.
    w_ih_t = 0.1 * jax.random.normal(ks[1], (embedding_dim, hidden_dim), jnp.float32)
    w_hh_t = 0.1 * jax.random.normal(ks[2], (hidden_dim, hidden_dim), jnp.float32)
    b_ih = 0.1 * jax.random.normal(ks[3], (1, hidden_dim), jnp.float32)
    b_hh = 0.1 * jax.random.normal(ks[4], (1, hidden_dim), jnp.float32)
    w_fc_t = 0.1 * jax.random.normal(ks[5], (hidden_dim, output_dim), jnp.float32)
    b_fc = 0.1 * jax.random.normal(ks[6], (1, output_dim), jnp.float32)
    return (emb_table, w_ih_t, w_hh_t, b_ih, b_hh, w_fc_t, b_fc)


def rnn_forward_ref(text, params):
    """Pure-JAX reference mirroring the PyTorch forward, for a sanity check."""
    emb_table, w_ih_t, w_hh_t, b_ih, b_hh, w_fc_t, b_fc = params
    embedded = jnp.take(emb_table, text, axis=0)          # [S, B, E]
    batch = text.shape[1]
    hidden = w_hh_t.shape[0]
    h = jnp.zeros((batch, hidden), jnp.float32)

    def step(h, x_t):
        h_new = jnp.tanh(x_t @ w_ih_t + h @ w_hh_t + b_ih[0] + b_hh[0])
        return h_new, None

    h_final, _ = lax.scan(step, h, embedded)
    return h_final @ w_fc_t + b_fc[0]


if __name__ == "__main__":
    # Small shapes consistent with the module's forward pass.
    input_dim = 100      # vocab size
    embedding_dim = 32
    hidden_dim = 32
    output_dim = 1
    seq_len = 8
    batch = 4

    key = jax.random.PRNGKey(0)
    k_param, k_text = jax.random.split(key)
    params = init_params(k_param, input_dim, embedding_dim, hidden_dim, output_dim)

    # text: [seq_len, batch] of token ids
    text = jax.random.randint(k_text, (seq_len, batch), 0, input_dim, dtype=jnp.int32)

    out = rnn_forward(text, params)
    out = jax.block_until_ready(out)

    ref = rnn_forward_ref(text, params)
    assert out.shape == (batch, output_dim)
    assert jnp.allclose(out, ref, atol=1e-5, rtol=1e-5)

    print("KERNEL_OK")
</pallas_src>

<mosaic_0001>
module attributes {stable_mosaic.version = 11 : i64} {
  func.func @rnn_fc_kernel(%arg0: i32, %arg1: memref<8x4x32xf32, #tpu.memory_space<vmem>>, %arg2: memref<32x32xf32, #tpu.memory_space<vmem>>, %arg3: memref<32x1xf32, #tpu.memory_space<vmem>>, %arg4: memref<1x1xf32, #tpu.memory_space<vmem>>, %arg5: memref<4x1xf32, #tpu.memory_space<vmem>>, %arg6: memref<4x32xf32, #tpu.memory_space<vmem>>) attributes {dimension_semantics = [#tpu.dimension_semantics<arbitrary>], iteration_bounds = array<i64: 1>, scalar_prefetch = 0 : i64, scratch_operands = 1 : i64, tpu.core_type = #tpu.core_type<tc>, window_params = [{transform_indices = @transform_0, window_bounds = array<i64: 8, 4, 32>}, {pipeline_mode = #tpu.pipeline_mode<synchronous>, transform_indices = @transform_1, window_bounds = array<i64: 32, 32>}, {pipeline_mode = #tpu.pipeline_mode<synchronous>, transform_indices = @transform_2, window_bounds = array<i64: 32, 1>}, {pipeline_mode = #tpu.pipeline_mode<synchronous>, transform_indices = @transform_3, window_bounds = array<i64: 1, 1>}, {pipeline_mode = #tpu.pipeline_mode<synchronous>, transform_indices = @transform_4, window_bounds = array<i64: 4, 1>}]} {
    %c0_i32 = arith.constant 0 : i32
    %0 = arith.cmpi eq, %arg0, %c0_i32 : i32
    %1 = arith.extui %0 : i1 to i32
    %c0_i32_0 = arith.constant 0 : i32
    %2 = arith.cmpi ne, %1, %c0_i32_0 : i32
    scf.if %2 {
      %cst_32 = arith.constant 0.000000e+00 : f32
      %57 = vector.broadcast %cst_32 : f32 to vector<4x32xf32>
      %c0_33 = arith.constant 0 : index
      %c0_34 = arith.constant 0 : index
      %58 = vector.load %arg6[%c0_33, %c0_34] : memref<4x32xf32, #tpu.memory_space<vmem>>, vector<4x32xf32>
      tpu.vector_store %arg6[%c0_33, %c0_34], %57 {strides = array<i32>} : memref<4x32xf32, #tpu.memory_space<vmem>>, vector<4x32xf32>,
    } else {
    }
    %c0 = arith.constant 0 : index
    %c0_1 = arith.constant 0 : index
    %3 = vector.load %arg2[%c0, %c0_1] : memref<32x32xf32, #tpu.memory_space<vmem>>, vector<32x32xf32>
    %c0_2 = arith.constant 0 : index
    %c0_3 = arith.constant 0 : index
    %4 = vector.load %arg6[%c0_2, %c0_3] : memref<4x32xf32, #tpu.memory_space<vmem>>, vector<4x32xf32>
    %c0_i32_4 = arith.constant 0 : i32
    %5 = arith.index_cast %c0_i32_4 : i32 to index
    %c0_5 = arith.constant 0 : index
    %c0_6 = arith.constant 0 : index
    %6 = vector.load %arg1[%5, %c0_5, %c0_6] : memref<8x4x32xf32, #tpu.memory_space<vmem>>, vector<1x4x32xf32>
    %7 = vector.shape_cast %6 : vector<1x4x32xf32> to vector<4x32xf32>
    %cst = arith.constant dense<0.000000e+00> : vector<4x32xf32>
    %8 = tpu.matmul %4, %3, %cst {dimension_numbers = #tpu.dot_dimension_numbers<[1], [0], [0], [1], [0, 0, 1, 1], [], []>} : vector<4x32xf32>, vector<32x32xf32>, vector<4x32xf32> -> vector<4x32xf32>
    %9 = arith.addf %7, %8 : vector<4x32xf32>
    %10 = math.tanh %9 : vector<4x32xf32>
    %c1_i32 = arith.constant 1 : i32
    %11 = arith.index_cast %c1_i32 : i32 to index
    %c0_7 = arith.constant 0 : index
    %c0_8 = arith.constant 0 : index
    %12 = vector.load %arg1[%11, %c0_7, %c0_8] : memref<8x4x32xf32, #tpu.memory_space<vmem>>, vector<1x4x32xf32>
    %13 = vector.shape_cast %12 : vector<1x4x32xf32> to vector<4x32xf32>
    %cst_9 = arith.constant dense<0.000000e+00> : vector<4x32xf32>
    %14 = tpu.matmul %10, %3, %cst_9 {dimension_numbers = #tpu.dot_dimension_numbers<[1], [0], [0], [1], [0, 0, 1, 1], [], []>} : vector<4x32xf32>, vector<32x32xf32>, vector<4x32xf32> -> vector<4x32xf32>
    %15 = arith.addf %13, %14 : vector<4x32xf32>
    %16 = math.tanh %15 : vector<4x32xf32>
    %c2_i32 = arith.constant 2 : i32
    %17 = arith.index_cast %c2_i32 : i32 to index
    %c0_10 = arith.constant 0 : index
    %c0_11 = arith.constant 0 : index
    %18 = vector.load %arg1[%17, %c0_10, %c0_11] : memref<8x4x32xf32, #tpu.memory_space<vmem>>, vector<1x4x32xf32>
    %19 = vector.shape_cast %18 : vector<1x4x32xf32> to vector<4x32xf32>
    %cst_12 = arith.constant dense<0.000000e+00> : vector<4x32xf32>
    %20 = tpu.matmul %16, %3, %cst_12 {dimension_numbers = #tpu.dot_dimension_numbers<[1], [0], [0], [1], [0, 0, 1, 1], [], []>} : vector<4x32xf32>, vector<32x32xf32>, vector<4x32xf32> -> vector<4x32xf32>
    %21 = arith.addf %19, %20 : vector<4x32xf32>
    %22 = math.tanh %21 : vector<4x32xf32>
    %c3_i32 = arith.constant 3 : i32
    %23 = arith.index_cast %c3_i32 : i32 to index
    %c0_13 = arith.constant 0 : index
    %c0_14 = arith.constant 0 : index
    %24 = vector.load %arg1[%23, %c0_13, %c0_14] : memref<8x4x32xf32, #tpu.memory_space<vmem>>, vector<1x4x32xf32>
    %25 = vector.shape_cast %24 : vector<1x4x32xf32> to vector<4x32xf32>
    %cst_15 = arith.constant dense<0.000000e+00> : vector<4x32xf32>
    %26 = tpu.matmul %22, %3, %cst_15 {dimension_numbers = #tpu.dot_dimension_numbers<[1], [0], [0], [1], [0, 0, 1, 1], [], []>} : vector<4x32xf32>, vector<32x32xf32>, vector<4x32xf32> -> vector<4x32xf32>
    %27 = arith.addf %25, %26 : vector<4x32xf32>
    %28 = math.tanh %27 : vector<4x32xf32>
    %c4_i32 = arith.constant 4 : i32
    %29 = arith.index_cast %c4_i32 : i32 to index
    %c0_16 = arith.constant 0 : index
    %c0_17 = arith.constant 0 : index
    %30 = vector.load %arg1[%29, %c0_16, %c0_17] : memref<8x4x32xf32, #tpu.memory_space<vmem>>, vector<1x4x32xf32>
    %31 = vector.shape_cast %30 : vector<1x4x32xf32> to vector<4x32xf32>
    %cst_18 = arith.constant dense<0.000000e+00> : vector<4x32xf32>
    %32 = tpu.matmul %28, %3, %cst_18 {dimension_numbers = #tpu.dot_dimension_numbers<[1], [0], [0], [1], [0, 0, 1, 1], [], []>} : vector<4x32xf32>, vector<32x32xf32>, vector<4x32xf32> -> vector<4x32xf32>
    %33 = arith.addf %31, %32 : vector<4x32xf32>
    %34 = math.tanh %33 : vector<4x32xf32>
    %c5_i32 = arith.constant 5 : i32
    %35 = arith.index_cast %c5_i32 : i32 to index
    %c0_19 = arith.constant 0 : index
    %c0_20 = arith.constant 0 : index
    %36 = vector.load %arg1[%35, %c0_19, %c0_20] : memref<8x4x32xf32, #tpu.memory_space<vmem>>, vector<1x4x32xf32>
    %37 = vector.shape_cast %36 : vector<1x4x32xf32> to vector<4x32xf32>
    %cst_21 = arith.constant dense<0.000000e+00> : vector<4x32xf32>
    %38 = tpu.matmul %34, %3, %cst_21 {dimension_numbers = #tpu.dot_dimension_numbers<[1], [0], [0], [1], [0, 0, 1, 1], [], []>} : vector<4x32xf32>, vector<32x32xf32>, vector<4x32xf32> -> vector<4x32xf32>
    %39 = arith.addf %37, %38 : vector<4x32xf32>
    %40 = math.tanh %39 : vector<4x32xf32>
    %c6_i32 = arith.constant 6 : i32
    %41 = arith.index_cast %c6_i32 : i32 to index
    %c0_22 = arith.constant 0 : index
    %c0_23 = arith.constant 0 : index
    %42 = vector.load %arg1[%41, %c0_22, %c0_23] : memref<8x4x32xf32, #tpu.memory_space<vmem>>, vector<1x4x32xf32>
    %43 = vector.shape_cast %42 : vector<1x4x32xf32> to vector<4x32xf32>
    %cst_24 = arith.constant dense<0.000000e+00> : vector<4x32xf32>
    %44 = tpu.matmul %40, %3, %cst_24 {dimension_numbers = #tpu.dot_dimension_numbers<[1], [0], [0], [1], [0, 0, 1, 1], [], []>} : vector<4x32xf32>, vector<32x32xf32>, vector<4x32xf32> -> vector<4x32xf32>
    %45 = arith.addf %43, %44 : vector<4x32xf32>
    %46 = math.tanh %45 : vector<4x32xf32>
    %c7_i32 = arith.constant 7 : i32
    %47 = arith.index_cast %c7_i32 : i32 to index
    %c0_25 = arith.constant 0 : index
    %c0_26 = arith.constant 0 : index
    %48 = vector.load %arg1[%47, %c0_25, %c0_26] : memref<8x4x32xf32, #tpu.memory_space<vmem>>, vector<1x4x32xf32>
    %49 = vector.shape_cast %48 : vector<1x4x32xf32> to vector<4x32xf32>
    %cst_27 = arith.constant dense<0.000000e+00> : vector<4x32xf32>
    %50 = tpu.matmul %46, %3, %cst_27 {dimension_numbers = #tpu.dot_dimension_numbers<[1], [0], [0], [1], [0, 0, 1, 1], [], []>} : vector<4x32xf32>, vector<32x32xf32>, vector<4x32xf32> -> vector<4x32xf32>
    %51 = arith.addf %49, %50 : vector<4x32xf32>
    %52 = math.tanh %51 : vector<4x32xf32>
    %c8_i32 = arith.constant 8 : i32
    %c0_28 = arith.constant 0 : index
    %c0_29 = arith.constant 0 : index
    %53 = vector.load %arg6[%c0_28, %c0_29] : memref<4x32xf32, #tpu.memory_space<vmem>>, vector<4x32xf32>
    tpu.vector_store %arg6[%c0_28, %c0_29], %52 {strides = array<i32>} : memref<4x32xf32, #tpu.memory_space<vmem>>, vector<4x32xf32>,
    %c0_i32_30 = arith.constant 0 : i32
    %54 = arith.cmpi eq, %arg0, %c0_i32_30 : i32
    %55 = arith.extui %54 : i1 to i32
    %c0_i32_31 = arith.constant 0 : i32
    %56 = arith.cmpi ne, %55, %c0_i32_31 : i32
    scf.if %56 {
      %c0_32 = arith.constant 0 : index
      %c0_33 = arith.constant 0 : index
      %57 = vector.load %arg3[%c0_32, %c0_33] : memref<32x1xf32, #tpu.memory_space<vmem>>, vector<32x1xf32>
      %cst_34 = arith.constant dense<0.000000e+00> : vector<4x1xf32>
      %58 = tpu.matmul %52, %57, %cst_34 {dimension_numbers = #tpu.dot_dimension_numbers<[1], [0], [0], [1], [0, 0, 1, 1], [], []>} : vector<4x32xf32>, vector<32x1xf32>, vector<4x1xf32> -> vector<4x1xf32>
      %c0_35 = arith.constant 0 : index
      %c0_36 = arith.constant 0 : index
      %59 = vector.load %arg4[%c0_35, %c0_36] : memref<1x1xf32, #tpu.memory_space<vmem>>, vector<1x1xf32>
      %60 = vector.broadcast %59 : vector<1x1xf32> to vector<4x1xf32>
      %61 = arith.addf %58, %60 : vector<4x1xf32>
      %c0_37 = arith.constant 0 : index
      %c0_38 = arith.constant 0 : index
      %62 = vector.load %arg5[%c0_37, %c0_38] : memref<4x1xf32, #tpu.memory_space<vmem>>, vector<4x1xf32>
      tpu.vector_store %arg5[%c0_37, %c0_38], %61 {strides = array<i32>} : memref<4x1xf32, #tpu.memory_space<vmem>>, vector<4x1xf32>,
    } else {
    }
    return
  }
  func.func @transform_0(%arg0: i32) -> (i32, i32, i32) {
    %c0_i32 = arith.constant 0 : i32
    %c0_i32_0 = arith.constant 0 : i32
    %c0_i32_1 = arith.constant 0 : i32
    return %arg0, %c0_i32, %c0_i32_0 : i32, i32, i32
  }
  func.func @transform_1(%arg0: i32) -> (i32, i32) {
    %c0_i32 = arith.constant 0 : i32
    %c0_i32_0 = arith.constant 0 : i32
    %c0_i32_1 = arith.constant 0 : i32
    return %c0_i32, %c0_i32_0 : i32, i32
  }
  func.func @transform_2(%arg0: i32) -> (i32, i32) {
    %c0_i32 = arith.constant 0 : i32
    %c0_i32_0 = arith.constant 0 : i32
    %c0_i32_1 = arith.constant 0 : i32
    return %c0_i32, %c0_i32_0 : i32, i32
  }
  func.func @transform_3(%arg0: i32) -> (i32, i32) {
    %c0_i32 = arith.constant 0 : i32
    %c0_i32_0 = arith.constant 0 : i32
    %c0_i32_1 = arith.constant 0 : i32
    return %c0_i32, %c0_i32_0 : i32, i32
  }
  func.func @transform_4(%arg0: i32) -> (i32, i32) {
    %c0_i32 = arith.constant 0 : i32
    %c0_i32_0 = arith.constant 0 : i32
    %c0_i32_1 = arith.constant 0 : i32
    return %c0_i32, %c0_i32_0 : i32, i32
  }
}

</mosaic_0001>

<llo_original>
// kernel: tpu_custom_call.1
$region0: #{tpu_custom_call.1}
  #allocation0 [shape = 'u32[]', space=smem, size = 0x4, offset = 0x4, fixed_abs, tag = 'smem constant byte address 0x4 - core index']
  #allocation1 [shape = 'u32[144,128]{1,0:T(1,128)}', space=vmem, size = 0x12000, scoped, tag = 'internal scratch']
  #allocation2 [shape = 'f32[4,32]{1,0:T(4,128)}', space=vmem, size = 0x800, scoped, tag = 'scratch operand']
  #allocation3 [shape = 'f32[1,1]{1,0:T(1,128)S(1)}', space=vmem, size = 0x200, scoped, tag = 'scoped memory for tpu_custom_call.1']
  %s0 = inlined_call_operand.vmem [shape: f32[8,4,32], index: 0, kind: input, shape index: {}]
  %s1 = inlined_call_operand.hbm [shape: f32[32,32], index: 1, kind: input, shape index: {}]
  %s2 = inlined_call_operand.vmem [shape: f32[32,1], index: 2, kind: input, shape index: {}]
  %s3 = inlined_call_operand.<no memory space> [shape: f32[1,1], index: 3, kind: input, shape index: {}]
  %s4 = inlined_call_operand.vmem [shape: f32[4,1], index: 4, kind: output, shape index: {}]
  %s5 = sld [smem:[#allocation0]]
  $region38: #{tpu_custom_call.1} parent=0
    _
  %s7 = ssub.s32 1, %s5
  %s8 = scalar_select 0, %s7, %s5
  %v9 = vstv %s3
  %10 = vst [vmem:[#allocation3] sm:$0x1] %v9
  $region1: #{tpu_custom_call.1} parent=0
    #allocation4 [shape = 'u8[16384]{0}', space=vmem, size = 0x4000, scoped, tag = 'input window, operand 1, single buffered']
    #allocation5 [shape = 's32[1]{0}', space=sflag, size = 0x4, scoped, tag = 'scoped memory for tpu_custom_call.1']
    %11 = vsyncpa [#allocation5], 0
    // Predicated region
    $region2: #{tpu_custom_call.1} parent=1 // pred_check
      _
    $region3: #{tpu_custom_call.1} parent=1 // pred_check_branch
      %13 = sbr.rel (0) target = $region5
    $region4: #{tpu_custom_call.1} parent=1 // pred_region
      _
    $region5: #{tpu_custom_call.1} parent=1 // pred_fallthru
      _
    // Predicated region
    $region6: #{tpu_custom_call.1} parent=1 // pred_check
      _
    $region7: #{tpu_custom_call.1} parent=1 // pred_check_branch
      %15 = sbr.rel (0) target = $region9
    $region8: #{tpu_custom_call.1} parent=1 // pred_region
      %s17 = ssub.s32 512, 512
      %18 = vsyncadd [#allocation5], %s17
      %s19 = sshll.u32 [#allocation4], 4
      %s20 = int_to_ptr.vmem [resolvable:$true] %s19
      %25 = dma.hbm_to_vmem [thread:$0]  %s1, 512, %s20, [#allocation5], 128, 128, 8
    $region9: #{tpu_custom_call.1} parent=1 // pred_fallthru
      _
    // Predicated region
    $region10: #{tpu_custom_call.1} parent=1 // pred_check
      _
    $region11: #{tpu_custom_call.1} parent=1 // pred_check_branch
      %27 = sbr.rel (0) target = $region13
    $region12: #{tpu_custom_call.1} parent=1 // pred_region
      _
    $region13: #{tpu_custom_call.1} parent=1 // pred_fallthru
      _
    // Predicated region
    $region14: #{tpu_custom_call.1} parent=1 // pred_check
      _
    $region15: #{tpu_custom_call.1} parent=1 // pred_check_branch
      %29 = sbr.rel (0) target = $region17
    $region16: #{tpu_custom_call.1} parent=1 // pred_region
      _
    $region17: #{tpu_custom_call.1} parent=1 // pred_fallthru
      _
    // Predicated region
    $region18: #{tpu_custom_call.1} parent=1 // pred_check
      _
    $region19: #{tpu_custom_call.1} parent=1 // pred_check_branch
      %31 = sbr.rel (0) target = $region21
    $region20: #{tpu_custom_call.1} parent=1 // pred_region
      %32 = dma.done [#allocation5], 512
    $region21: #{tpu_custom_call.1} parent=1 // pred_fallthru
      _
    %p33 = scmp.eq.s32.totalorder 0, 0
    // Predicated region
    $region22: #{tpu_custom_call.1} parent=1 // pred_check
      %p34 = pneg %p33
    $region23: #{tpu_custom_call.1} parent=1 // pred_check_branch
      %36 = sbr.rel (%p34) target = $region25
    $region24: #{tpu_custom_call.1} parent=1 // pred_region
      %vm37 = vcmask 257024
      %38 = vst.msk [vmem:[#allocation2] sm:$0xf] %vm37, 0.0
    $region25: #{tpu_custom_call.1} parent=1 // pred_fallthru
      _
    %v39 = vld [vmem:[#allocation4] sm:$0xff]
    %v40 = vld [vmem:[#allocation4 + $0x8] sm:$0xff]
    %v41 = vld [vmem:[#allocation4 + $0x10] sm:$0xff]
    %v42 = vld [vmem:[#allocation4 + $0x18] sm:$0xff]
    %v43 = vld [vmem:[#allocation2] sm:$0xf]
    %v44 = vld [vmem:[%s0] sm:$0xf]
    %vm45 = vcmask 261120
    %v47 = vsel %vm45, %v43, 0
    %49 = vmatprep.subr.mxu0 0.0
    %50 = vmatpush1.msra.mxu0 0.0
    %51 = vmatprep.subr.mxu0 0.0
    %52 = vmatpush1.msra.mxu0 0.0
    %53 = vmatprep.subr.mxu0 0.0
    %54 = vmatpush1.msra.mxu0 0.0
    %55 = vmatprep.subr.mxu0 0.0
    %56 = vmatpush1.msra.mxu0 0.0
    %57 = vmatprep.subr.mxu0 0.0
    %58 = vmatpush1.msra.mxu0 0.0
    %59 = vmatprep.subr.mxu0 0.0
    %60 = vmatpush1.msra.mxu0 0.0
    %61 = vmatprep.subr.mxu0 0.0
    %62 = vmatpush1.msra.mxu0 0.0
    %63 = vmatprep.subr.mxu0 0.0
    %64 = vmatpush1.msra.mxu0 0.0
    %65 = vmatprep.subr.mxu0 0.0
    %66 = vmatpush1.msra.mxu0 0.0
    %67 = vmatprep.subr.mxu0 0.0
    %68 = vmatpush1.msra.mxu0 0.0
    %69 = vmatprep.subr.mxu0 0.0
    %70 = vmatpush1.msra.mxu0 0.0
    %71 = vmatprep.subr.mxu0 0.0
    %72 = vmatpush1.msra.mxu0 0.0
    %73 = vmatprep.subr.mxu0 0.0
    %74 = vmatpush1.msra.mxu0 %v42
    %75 = vmatprep.subr.mxu0 0.0
    %76 = vmatpush1.msra.mxu0 %v41
    %77 = vmatprep.subr.mxu0 0.0
    %78 = vmatpush1.msra.mxu0 %v40
    %79 = vmatprep.subr.mxu0 0.0
    %80 = vmatpush1.msra.mxu0 %v39
    %81 = vmatprep.subr.mxu0 0.0
    %82 = vmatpush2.msra.mxu0 0.0
    %83 = vmatprep.subr.mxu0 0.0
    %84 = vmatpush2.msra.mxu0 0.0
    %85 = vmatprep.subr.mxu0 0.0
    %86 = vmatpush2.msra.mxu0 0.0
    %87 = vmatprep.subr.mxu0 0.0
    %88 = vmatpush2.msra.mxu0 0.0
    %89 = vmatprep.subr.mxu0 0.0
    %90 = vmatpush2.msra.mxu0 0.0
    %91 = vmatprep.subr.mxu0 0.0
    %92 = vmatpush2.msra.mxu0 0.0
    %93 = vmatprep.subr.mxu0 0.0
    %94 = vmatpush2.msra.mxu0 0.0
    %95 = vmatprep.subr.mxu0 0.0
    %96 = vmatpush2.msra.mxu0 0.0
    %97 = vmatprep.subr.mxu0 0.0
    %98 = vmatpush2.msra.mxu0 0.0
    %99 = vmatprep.subr.mxu0 0.0
    %100 = vmatpush2.msra.mxu0 0.0
    %101 = vmatprep.subr.mxu0 0.0
    %102 = vmatpush2.msra.mxu0 0.0
    %103 = vmatprep.subr.mxu0 0.0
    %104 = vmatpush2.msra.mxu0 0.0
    %105 = vmatprep.subr.mxu0 0.0
    %106 = vmatpush2.msra.mxu0 0.0
    %107 = vmatprep.subr.mxu0 0.0
    %108 = vmatpush2.msra.mxu0 0.0
    %109 = vmatprep.subr.mxu0 0.0
    %110 = vmatpush2.msra.mxu0 0.0
    %111 = vmatprep.subr.mxu0 0.0
    %112 = vmatpush2.msra.mxu0 0.0
    %113 = vmatprep.mubr.f32.mxu0 0.0
    %114 = vmatmul.mubr.f32.gmra.mxu0 %v47
    %v115 = vpop.f32.mrf.mxu0
    %v116 = vadd.f32 0.0, %v115
    %v117 = vpop.f32.mrf.mxu0
    %118 = vdwg.mxu0
    %v119 = vadd.f32 %v44, %v116
    %v120 = vtanh.pop %v119
    %s121 = scalar_lea.vmem %s0, 4
    %v122 = vld [vmem:[%s121] sm:$0xf]
    %v124 = vsel %vm45, %v120, 0
    %126 = vmatprep.subr.mxu0 0.0
    %127 = vmatpush1.msra.mxu0 0.0
    %128 = vmatprep.subr.mxu0 0.0
    %129 = vmatpush1.msra.mxu0 0.0
    %130 = vmatprep.subr.mxu0 0.0
    %131 = vmatpush1.msra.mxu0 0.0
    %132 = vmatprep.subr.mxu0 0.0
    %133 = vmatpush1.msra.mxu0 0.0
    %134 = vmatprep.subr.mxu0 0.0
    %135 = vmatpush1.msra.mxu0 0.0
    %136 = vmatprep.subr.mxu0 0.0
    %137 = vmatpush1.msra.mxu0 0.0
    %138 = vmatprep.subr.mxu0 0.0
    %139 = vmatpush1.msra.mxu0 0.0
    %140 = vmatprep.subr.mxu0 0.0
    %141 = vmatpush1.msra.mxu0 0.0
    %142 = vmatprep.subr.mxu0 0.0
    %143 = vmatpush1.msra.mxu0 0.0
    %144 = vmatprep.subr.mxu0 0.0
    %145 = vmatpush1.msra.mxu0 0.0
    %146 = vmatprep.subr.mxu0 0.0
    %147 = vmatpush1.msra.mxu0 0.0
    %148 = vmatprep.subr.mxu0 0.0
    %149 = vmatpush1.msra.mxu0 0.0
    %150 = vmatprep.subr.mxu0 0.0
    %151 = vmatpush1.msra.mxu0 %v42
    %152 = vmatprep.subr.mxu0 0.0
    %153 = vmatpush1.msra.mxu0 %v41
    %154 = vmatprep.subr.mxu0 0.0
    %155 = vmatpush1.msra.mxu0 %v40
    %156 = vmatprep.subr.mxu0 0.0
    %157 = vmatpush1.msra.mxu0 %v39
    %158 = vmatprep.subr.mxu0 0.0
    %159 = vmatpush2.msra.mxu0 0.0
    %160 = vmatprep.subr.mxu0 0.0
    %161 = vmatpush2.msra.mxu0 0.0
    %162 = vmatprep.subr.mxu0 0.0
    %163 = vmatpush2.msra.mxu0 0.0
    %164 = vmatprep.subr.mxu0 0.0
    %165 = vmatpush2.msra.mxu0 0.0
    %166 = vmatprep.subr.mxu0 0.0
    %167 = vmatpush2.msra.mxu0 0.0
    %168 = vmatprep.subr.mxu0 0.0
    %169 = vmatpush2.msra.mxu0 0.0
    %170 = vmatprep.subr.mxu0 0.0
    %171 = vmatpush2.msra.mxu0 0.0
    %172 = vmatprep.subr.mxu0 0.0
    %173 = vmatpush2.msra.mxu0 0.0
    %174 = vmatprep.subr.mxu0 0.0
    %175 = vmatpush2.msra.mxu0 0.0
    %176 = vmatprep.subr.mxu0 0.0
    %177 = vmatpush2.msra.mxu0 0.0
    %178 = vmatprep.subr.mxu0 0.0
    %179 = vmatpush2.msra.mxu0 0.0
    %180 = vmatprep.subr.mxu0 0.0
    %181 = vmatpush2.msra.mxu0 0.0
    %182 = vmatprep.subr.mxu0 0.0
    %183 = vmatpush2.msra.mxu0 0.0
    %184 = vmatprep.subr.mxu0 0.0
    %185 = vmatpush2.msra.mxu0 0.0
    %186 = vmatprep.subr.mxu0 0.0
    %187 = vmatpush2.msra.mxu0 0.0
    %188 = vmatprep.subr.mxu0 0.0
    %189 = vmatpush2.msra.mxu0 0.0
    %190 = vmatprep.mubr.f32.mxu0 0.0
    %191 = vmatmul.mubr.f32.gmra.mxu0 %v124
    %v192 = vpop.f32.mrf.mxu0
    %v193 = vadd.f32 0.0, %v192
    %v194 = vpop.f32.mrf.mxu0
    %195 = vdwg.mxu0
    %v196 = vadd.f32 %v122, %v193
    %v197 = vtanh.pop %v196
    %s198 = scalar_lea.vmem %s0, 8
    %v199 = vld [vmem:[%s198] sm:$0xf]
    %v201 = vsel %vm45, %v197, 0
    %203 = vmatprep.subr.mxu0 0.0
    %204 = vmatpush1.msra.mxu0 0.0
    %205 = vmatprep.subr.mxu0 0.0
    %206 = vmatpush1.msra.mxu0 0.0
    %207 = vmatprep.subr.mxu0 0.0
    %208 = vmatpush1.msra.mxu0 0.0
    %209 = vmatprep.subr.mxu0 0.0
    %210 = vmatpush1.msra.mxu0 0.0
    %211 = vmatprep.subr.mxu0 0.0
    %212 = vmatpush1.msra.mxu0 0.0
    %213 = vmatprep.subr.mxu0 0.0
    %214 = vmatpush1.msra.mxu0 0.0
    %215 = vmatprep.subr.mxu0 0.0
    %216 = vmatpush1.msra.mxu0 0.0
    %217 = vmatprep.subr.mxu0 0.0
    %218 = vmatpush1.msra.mxu0 0.0
    %219 = vmatprep.subr.mxu0 0.0
    %220 = vmatpush1.msra.mxu0 0.0
    %221 = vmatprep.subr.mxu0 0.0
    %222 = vmatpush1.msra.mxu0 0.0
    %223 = vmatprep.subr.mxu0 0.0
    %224 = vmatpush1.msra.mxu0 0.0
    %225 = vmatprep.subr.mxu0 0.0
    %226 = vmatpush1.msra.mxu0 0.0
    %227 = vmatprep.subr.mxu0 0.0
    %228 = vmatpush1.msra.mxu0 %v42
    %229 = vmatprep.subr.mxu0 0.0
    %230 = vmatpush1.msra.mxu0 %v41
    %231 = vmatprep.subr.mxu0 0.0
    %232 = vmatpush1.msra.mxu0 %v40
    %233 = vmatprep.subr.mxu0 0.0
    %234 = vmatpush1.msra.mxu0 %v39
    %235 = vmatprep.subr.mxu0 0.0
    %236 = vmatpush2.msra.mxu0 0.0
    %237 = vmatprep.subr.mxu0 0.0
    %238 = vmatpush2.msra.mxu0 0.0
    %239 = vmatprep.subr.mxu0 0.0
    %240 = vmatpush2.msra.mxu0 0.0
    %241 = vmatprep.subr.mxu0 0.0
    %242 = vmatpush2.msra.mxu0 0.0
    %243 = vmatprep.subr.mxu0 0.0
    %244 = vmatpush2.msra.mxu0 0.0
    %245 = vmatprep.subr.mxu0 0.0
    %246 = vmatpush2.msra.mxu0 0.0
    %247 = vmatprep.subr.mxu0 0.0
    %248 = vmatpush2.msra.mxu0 0.0
    %249 = vmatprep.subr.mxu0 0.0
    %250 = vmatpush2.msra.mxu0 0.0
    %251 = vmatprep.subr.mxu0 0.0
    %252 = vmatpush2.msra.mxu0 0.0
    %253 = vmatprep.subr.mxu0 0.0
    %254 = vmatpush2.msra.mxu0 0.0
    %255 = vmatprep.subr.mxu0 0.0
    %256 = vmatpush2.msra.mxu0 0.0
    %257 = vmatprep.subr.mxu0 0.0
    %258 = vmatpush2.msra.mxu0 0.0
    %259 = vmatprep.subr.mxu0 0.0
    %260 = vmatpush2.msra.mxu0 0.0
    %261 = vmatprep.subr.mxu0 0.0
    %262 = vmatpush2.msra.mxu0 0.0
    %263 = vmatprep.subr.mxu0 0.0
    %264 = vmatpush2.msra.mxu0 0.0
    %265 = vmatprep.subr.mxu0 0.0
    %266 = vmatpush2.msra.mxu0 0.0
    %267 = vmatprep.mubr.f32.mxu0 0.0
    %268 = vmatmul.mubr.f32.gmra.mxu0 %v201
    %v269 = vpop.f32.mrf.mxu0
    %v270 = vadd.f32 0.0, %v269
    %v271 = vpop.f32.mrf.mxu0
    %272 = vdwg.mxu0
    %v273 = vadd.f32 %v199, %v270
    %v274 = vtanh.pop %v273
    %s275 = scalar_lea.vmem %s0, 12
    %v276 = vld [vmem:[%s275] sm:$0xf]
    %v278 = vsel %vm45, %v274, 0
    %280 = vmatprep.subr.mxu0 0.0
    %281 = vmatpush1.msra.mxu0 0.0
    %282 = vmatprep.subr.mxu0 0.0
    %283 = vmatpush1.msra.mxu0 0.0
    %284 = vmatprep.subr.mxu0 0.0
    %285 = vmatpush1.msra.mxu0 0.0
    %286 = vmatprep.subr.mxu0 0.0
    %287 = vmatpush1.msra.mxu0 0.0
    %288 = vmatprep.subr.mxu0 0.0
    %289 = vmatpush1.msra.mxu0 0.0
    %290 = vmatprep.subr.mxu0 0.0
    %291 = vmatpush1.msra.mxu0 0.0
    %292 = vmatprep.subr.mxu0 0.0
    %293 = vmatpush1.msra.mxu0 0.0
    %294 = vmatprep.subr.mxu0 0.0
    %295 = vmatpush1.msra.mxu0 0.0
    %296 = vmatprep.subr.mxu0 0.0
    %297 = vmatpush1.msra.mxu0 0.0
    %298 = vmatprep.subr.mxu0 0.0
    %299 = vmatpush1.msra.mxu0 0.0
    %300 = vmatprep.subr.mxu0 0.0
    %301 = vmatpush1.msra.mxu0 0.0
    %302 = vmatprep.subr.mxu0 0.0
    %303 = vmatpush1.msra.mxu0 0.0
    %304 = vmatprep.subr.mxu0 0.0
    %305 = vmatpush1.msra.mxu0 %v42
    %306 = vmatprep.subr.mxu0 0.0
    %307 = vmatpush1.msra.mxu0 %v41
    %308 = vmatprep.subr.mxu0 0.0
    %309 = vmatpush1.msra.mxu0 %v40
    %310 = vmatprep.subr.mxu0 0.0
    %311 = vmatpush1.msra.mxu0 %v39
    %312 = vmatprep.subr.mxu0 0.0
    %313 = vmatpush2.msra.mxu0 0.0
    %314 = vmatprep.subr.mxu0 0.0
    %315 = vmatpush2.msra.mxu0 0.0
    %316 = vmatprep.subr.mxu0 0.0
    %317 = vmatpush2.msra.mxu0 0.0
    %318 = vmatprep.subr.mxu0 0.0
    %319 = vmatpush2.msra.mxu0 0.0
    %320 = vmatprep.subr.mxu0 0.0
    %321 = vmatpush2.msra.mxu0 0.0
    %322 = vmatprep.subr.mxu0 0.0
    %323 = vmatpush2.msra.mxu0 0.0
    %324 = vmatprep.subr.mxu0 0.0
    %325 = vmatpush2.msra.mxu0 0.0
    %326 = vmatprep.subr.mxu0 0.0
    %327 = vmatpush2.msra.mxu0 0.0
    %328 = vmatprep.subr.mxu0 0.0
    %329 = vmatpush2.msra.mxu0 0.0
    %330 = vmatprep.subr.mxu0 0.0
    %331 = vmatpush2.msra.mxu0 0.0
    %332 = vmatprep.subr.mxu0 0.0
    %333 = vmatpush2.msra.mxu0 0.0
    %334 = vmatprep.subr.mxu0 0.0
    %335 = vmatpush2.msra.mxu0 0.0
    %336 = vmatprep.subr.mxu0 0.0
    %337 = vmatpush2.msra.mxu0 0.0
    %338 = vmatprep.subr.mxu0 0.0
    %339 = vmatpush2.msra.mxu0 0.0
    %340 = vmatprep.subr.mxu0 0.0
    %341 = vmatpush2.msra.mxu0 0.0
    %342 = vmatprep.subr.mxu0 0.0
    %343 = vmatpush2.msra.mxu0 0.0
    %344 = vmatprep.mubr.f32.mxu0 0.0
    %345 = vmatmul.mubr.f32.gmra.mxu0 %v278
    %v346 = vpop.f32.mrf.mxu0
    %v347 = vadd.f32 0.0, %v346
    %v348 = vpop.f32.mrf.mxu0
    %349 = vdwg.mxu0
    %v350 = vadd.f32 %v276, %v347
    %v351 = vtanh.pop %v350
    %s352 = scalar_lea.vmem %s0, 16
    %v353 = vld [vmem:[%s352] sm:$0xf]
    %v355 = vsel %vm45, %v351, 0
    %357 = vmatprep.subr.mxu0 0.0
    %358 = vmatpush1.msra.mxu0 0.0
    %359 = vmatprep.subr.mxu0 0.0
    %360 = vmatpush1.msra.mxu0 0.0
    %361 = vmatprep.subr.mxu0 0.0
    %362 = vmatpush1.msra.mxu0 0.0
    %363 = vmatprep.subr.mxu0 0.0
    %364 = vmatpush1.msra.mxu0 0.0
    %365 = vmatprep.subr.mxu0 0.0
    %366 = vmatpush1.msra.mxu0 0.0
    %367 = vmatprep.subr.mxu0 0.0
    %368 = vmatpush1.msra.mxu0 0.0
    %369 = vmatprep.subr.mxu0 0.0
    %370 = vmatpush1.msra.mxu0 0.0
    %371 = vmatprep.subr.mxu0 0.0
    %372 = vmatpush1.msra.mxu0 0.0
    %373 = vmatprep.subr.mxu0 0.0
    %374 = vmatpush1.msra.mxu0 0.0
    %375 = vmatprep.subr.mxu0 0.0
    %376 = vmatpush1.msra.mxu0 0.0
    %377 = vmatprep.subr.mxu0 0.0
    %378 = vmatpush1.msra.mxu0 0.0
    %379 = vmatprep.subr.mxu0 0.0
    %380 = vmatpush1.msra.mxu0 0.0
    %381 = vmatprep.subr.mxu0 0.0
    %382 = vmatpush1.msra.mxu0 %v42
    %383 = vmatprep.subr.mxu0 0.0
    %384 = vmatpush1.msra.mxu0 %v41
    %385 = vmatprep.subr.mxu0 0.0
    %386 = vmatpush1.msra.mxu0 %v40
    %387 = vmatprep.subr.mxu0 0.0
    %388 = vmatpush1.msra.mxu0 %v39
    %389 = vmatprep.subr.mxu0 0.0
    %390 = vmatpush2.msra.mxu0 0.0
    %391 = vmatprep.subr.mxu0 0.0
    %392 = vmatpush2.msra.mxu0 0.0
    %393 = vmatprep.subr.mxu0 0.0
    %394 = vmatpush2.msra.mxu0 0.0
    %395 = vmatprep.subr.mxu0 0.0
    %396 = vmatpush2.msra.mxu0 0.0
    %397 = vmatprep.subr.mxu0 0.0
    %398 = vmatpush2.msra.mxu0 0.0
    %399 = vmatprep.subr.mxu0 0.0
    %400 = vmatpush2.msra.mxu0 0.0
    %401 = vmatprep.subr.mxu0 0.0
    %402 = vmatpush2.msra.mxu0 0.0
    %403 = vmatprep.subr.mxu0 0.0
    %404 = vmatpush2.msra.mxu0 0.0
    %405 = vmatprep.subr.mxu0 0.0
    %406 = vmatpush2.msra.mxu0 0.0
    %407 = vmatprep.subr.mxu0 0.0
    %408 = vmatpush2.msra.mxu0 0.0
    %409 = vmatprep.subr.mxu0 0.0
    %410 = vmatpush2.msra.mxu0 0.0
    %411 = vmatprep.subr.mxu0 0.0
    %412 = vmatpush2.msra.mxu0 0.0
    %413 = vmatprep.subr.mxu0 0.0
    %414 = vmatpush2.msra.mxu0 0.0
    %415 = vmatprep.subr.mxu0 0.0
    %416 = vmatpush2.msra.mxu0 0.0
    %417 = vmatprep.subr.mxu0 0.0
    %418 = vmatpush2.msra.mxu0 0.0
    %419 = vmatprep.subr.mxu0 0.0
    %420 = vmatpush2.msra.mxu0 0.0
    %421 = vmatprep.mubr.f32.mxu0 0.0
    %422 = vmatmul.mubr.f32.gmra.mxu0 %v355
    %v423 = vpop.f32.mrf.mxu0
    %v424 = vadd.f32 0.0, %v423
    %v425 = vpop.f32.mrf.mxu0
    %426 = vdwg.mxu0
    %v427 = vadd.f32 %v353, %v424
    %v428 = vtanh.pop %v427
    %s429 = scalar_lea.vmem %s0, 20
    %v430 = vld [vmem:[%s429] sm:$0xf]
    %v432 = vsel %vm45, %v428, 0
    %434 = vmatprep.subr.mxu0 0.0
    %435 = vmatpush1.msra.mxu0 0.0
    %436 = vmatprep.subr.mxu0 0.0
    %437 = vmatpush1.msra.mxu0 0.0
    %438 = vmatprep.subr.mxu0 0.0
    %439 = vmatpush1.msra.mxu0 0.0
    %440 = vmatprep.subr.mxu0 0.0
    %441 = vmatpush1.msra.mxu0 0.0
    %442 = vmatprep.subr.mxu0 0.0
    %443 = vmatpush1.msra.mxu0 0.0
    %444 = vmatprep.subr.mxu0 0.0
    %445 = vmatpush1.msra.mxu0 0.0
    %446 = vmatprep.subr.mxu0 0.0
    %447 = vmatpush1.msra.mxu0 0.0
    %448 = vmatprep.subr.mxu0 0.0
    %449 = vmatpush1.msra.mxu0 0.0
    %450 = vmatprep.subr.mxu0 0.0
    %451 = vmatpush1.msra.mxu0 0.0
    %452 = vmatprep.subr.mxu0 0.0
    %453 = vmatpush1.msra.mxu0 0.0
    %454 = vmatprep.subr.mxu0 0.0
    %455 = vmatpush1.msra.mxu0 0.0
    %456 = vmatprep.subr.mxu0 0.0
    %457 = vmatpush1.msra.mxu0 0.0
    %458 = vmatprep.subr.mxu0 0.0
    %459 = vmatpush1.msra.mxu0 %v42
    %460 = vmatprep.subr.mxu0 0.0
    %461 = vmatpush1.msra.mxu0 %v41
    %462 = vmatprep.subr.mxu0 0.0
    %463 = vmatpush1.msra.mxu0 %v40
    %464 = vmatprep.subr.mxu0 0.0
    %465 = vmatpush1.msra.mxu0 %v39
    %466 = vmatprep.subr.mxu0 0.0
    %467 = vmatpush2.msra.mxu0 0.0
    %468 = vmatprep.subr.mxu0 0.0
    %469 = vmatpush2.msra.mxu0 0.0
    %470 = vmatprep.subr.mxu0 0.0
    %471 = vmatpush2.msra.mxu0 0.0
    %472 = vmatprep.subr.mxu0 0.0
    %473 = vmatpush2.msra.mxu0 0.0
    %474 = vmatprep.subr.mxu0 0.0
    %475 = vmatpush2.msra.mxu0 0.0
    %476 = vmatprep.subr.mxu0 0.0
    %477 = vmatpush2.msra.mxu0 0.0
    %478 = vmatprep.subr.mxu0 0.0
    %479 = vmatpush2.msra.mxu0 0.0
    %480 = vmatprep.subr.mxu0 0.0
    %481 = vmatpush2.msra.mxu0 0.0
    %482 = vmatprep.subr.mxu0 0.0
    %483 = vmatpush2.msra.mxu0 0.0
    %484 = vmatprep.subr.mxu0 0.0
    %485 = vmatpush2.msra.mxu0 0.0
    %486 = vmatprep.subr.mxu0 0.0
    %487 = vmatpush2.msra.mxu0 0.0
    %488 = vmatprep.subr.mxu0 0.0
    %489 = vmatpush2.msra.mxu0 0.0
    %490 = vmatprep.subr.mxu0 0.0
    %491 = vmatpush2.msra.mxu0 0.0
    %492 = vmatprep.subr.mxu0 0.0
    %493 = vmatpush2.msra.mxu0 0.0
    %494 = vmatprep.subr.mxu0 0.0
    %495 = vmatpush2.msra.mxu0 0.0
    %496 = vmatprep.subr.mxu0 0.0
    %497 = vmatpush2.msra.mxu0 0.0
    %498 = vmatprep.mubr.f32.mxu0 0.0
    %499 = vmatmul.mubr.f32.gmra.mxu0 %v432
    %v500 = vpop.f32.mrf.mxu0
    %v501 = vadd.f32 0.0, %v500
    %v502 = vpop.f32.mrf.mxu0
    %503 = vdwg.mxu0
    %v504 = vadd.f32 %v430, %v501
    %v505 = vtanh.pop %v504
    %s506 = scalar_lea.vmem %s0, 24
    %v507 = vld [vmem:[%s506] sm:$0xf]
    %v509 = vsel %vm45, %v505, 0
    %511 = vmatprep.subr.mxu0 0.0
    %512 = vmatpush1.msra.mxu0 0.0
    %513 = vmatprep.subr.mxu0 0.0
    %514 = vmatpush1.msra.mxu0 0.0
    %515 = vmatprep.subr.mxu0 0.0
    %516 = vmatpush1.msra.mxu0 0.0
    %517 = vmatprep.subr.mxu0 0.0
    %518 = vmatpush1.msra.mxu0 0.0
    %519 = vmatprep.subr.mxu0 0.0
    %520 = vmatpush1.msra.mxu0 0.0
    %521 = vmatprep.subr.mxu0 0.0
    %522 = vmatpush1.msra.mxu0 0.0
    %523 = vmatprep.subr.mxu0 0.0
    %524 = vmatpush1.msra.mxu0 0.0
    %525 = vmatprep.subr.mxu0 0.0
    %526 = vmatpush1.msra.mxu0 0.0
    %527 = vmatprep.subr.mxu0 0.0
    %528 = vmatpush1.msra.mxu0 0.0
    %529 = vmatprep.subr.mxu0 0.0
    %530 = vmatpush1.msra.mxu0 0.0
    %531 = vmatprep.subr.mxu0 0.0
    %532 = vmatpush1.msra.mxu0 0.0
    %533 = vmatprep.subr.mxu0 0.0
    %534 = vmatpush1.msra.mxu0 0.0
    %535 = vmatprep.subr.mxu0 0.0
    %536 = vmatpush1.msra.mxu0 %v42
    %537 = vmatprep.subr.mxu0 0.0
    %538 = vmatpush1.msra.mxu0 %v41
    %539 = vmatprep.subr.mxu0 0.0
    %540 = vmatpush1.msra.mxu0 %v40
    %541 = vmatprep.subr.mxu0 0.0
    %542 = vmatpush1.msra.mxu0 %v39
    %543 = vmatprep.subr.mxu0 0.0
    %544 = vmatpush2.msra.mxu0 0.0
    %545 = vmatprep.subr.mxu0 0.0
    %546 = vmatpush2.msra.mxu0 0.0
    %547 = vmatprep.subr.mxu0 0.0
    %548 = vmatpush2.msra.mxu0 0.0
    %549 = vmatprep.subr.mxu0 0.0
    %550 = vmatpush2.msra.mxu0 0.0
    %551 = vmatprep.subr.mxu0 0.0
    %552 = vmatpush2.msra.mxu0 0.0
    %553 = vmatprep.subr.mxu0 0.0
    %554 = vmatpush2.msra.mxu0 0.0
    %555 = vmatprep.subr.mxu0 0.0
    %556 = vmatpush2.msra.mxu0 0.0
    %557 = vmatprep.subr.mxu0 0.0
    %558 = vmatpush2.msra.mxu0 0.0
    %559 = vmatprep.subr.mxu0 0.0
    %560 = vmatpush2.msra.mxu0 0.0
    %561 = vmatprep.subr.mxu0 0.0
    %562 = vmatpush2.msra.mxu0 0.0
    %563 = vmatprep.subr.mxu0 0.0
    %564 = vmatpush2.msra.mxu0 0.0
    %565 = vmatprep.subr.mxu0 0.0
    %566 = vmatpush2.msra.mxu0 0.0
    %567 = vmatprep.subr.mxu0 0.0
    %568 = vmatpush2.msra.mxu0 0.0
    %569 = vmatprep.subr.mxu0 0.0
    %570 = vmatpush2.msra.mxu0 0.0
    %571 = vmatprep.subr.mxu0 0.0
    %572 = vmatpush2.msra.mxu0 0.0
    %573 = vmatprep.subr.mxu0 0.0
    %574 = vmatpush2.msra.mxu0 0.0
    %575 = vmatprep.mubr.f32.mxu0 0.0
    %576 = vmatmul.mubr.f32.gmra.mxu0 %v509
    %v577 = vpop.f32.mrf.mxu0
    %v578 = vadd.f32 0.0, %v577
    %v579 = vpop.f32.mrf.mxu0
    %580 = vdwg.mxu0
    %v581 = vadd.f32 %v507, %v578
    %v582 = vtanh.pop %v581
    %s583 = scalar_lea.vmem %s0, 28
    %v584 = vld [vmem:[%s583] sm:$0xf]
    %v586 = vsel %vm45, %v582, 0
    %588 = vmatprep.subr.mxu0 0.0
    %589 = vmatpush1.msra.mxu0 0.0
    %590 = vmatprep.subr.mxu0 0.0
    %591 = vmatpush1.msra.mxu0 0.0
    %592 = vmatprep.subr.mxu0 0.0
    %593 = vmatpush1.msra.mxu0 0.0
    %594 = vmatprep.subr.mxu0 0.0
    %595 = vmatpush1.msra.mxu0 0.0
    %596 = vmatprep.subr.mxu0 0.0
    %597 = vmatpush1.msra.mxu0 0.0
    %598 = vmatprep.subr.mxu0 0.0
    %599 = vmatpush1.msra.mxu0 0.0
    %600 = vmatprep.subr.mxu0 0.0
    %601 = vmatpush1.msra.mxu0 0.0
    %602 = vmatprep.subr.mxu0 0.0
    %603 = vmatpush1.msra.mxu0 0.0
    %604 = vmatprep.subr.mxu0 0.0
    %605 = vmatpush1.msra.mxu0 0.0
    %606 = vmatprep.subr.mxu0 0.0
    %607 = vmatpush1.msra.mxu0 0.0
    %608 = vmatprep.subr.mxu0 0.0
    %609 = vmatpush1.msra.mxu0 0.0
    %610 = vmatprep.subr.mxu0 0.0
    %611 = vmatpush1.msra.mxu0 0.0
    %612 = vmatprep.subr.mxu0 0.0
    %613 = vmatpush1.msra.mxu0 %v42
    %614 = vmatprep.subr.mxu0 0.0
    %615 = vmatpush1.msra.mxu0 %v41
    %616 = vmatprep.subr.mxu0 0.0
    %617 = vmatpush1.msra.mxu0 %v40
    %618 = vmatprep.subr.mxu0 0.0
    %619 = vmatpush1.msra.mxu0 %v39
    %620 = vmatprep.subr.mxu0 0.0
    %621 = vmatpush2.msra.mxu0 0.0
    %622 = vmatprep.subr.mxu0 0.0
    %623 = vmatpush2.msra.mxu0 0.0
    %624 = vmatprep.subr.mxu0 0.0
    %625 = vmatpush2.msra.mxu0 0.0
    %626 = vmatprep.subr.mxu0 0.0
    %627 = vmatpush2.msra.mxu0 0.0
    %628 = vmatprep.subr.mxu0 0.0
    %629 = vmatpush2.msra.mxu0 0.0
    %630 = vmatprep.subr.mxu0 0.0
    %631 = vmatpush2.msra.mxu0 0.0
    %632 = vmatprep.subr.mxu0 0.0
    %633 = vmatpush2.msra.mxu0 0.0
    %634 = vmatprep.subr.mxu0 0.0
    %635 = vmatpush2.msra.mxu0 0.0
    %636 = vmatprep.subr.mxu0 0.0
    %637 = vmatpush2.msra.mxu0 0.0
    %638 = vmatprep.subr.mxu0 0.0
    %639 = vmatpush2.msra.mxu0 0.0
    %640 = vmatprep.subr.mxu0 0.0
    %641 = vmatpush2.msra.mxu0 0.0
    %642 = vmatprep.subr.mxu0 0.0
    %643 = vmatpush2.msra.mxu0 0.0
    %644 = vmatprep.subr.mxu0 0.0
    %645 = vmatpush2.msra.mxu0 0.0
    %646 = vmatprep.subr.mxu0 0.0
    %647 = vmatpush2.msra.mxu0 0.0
    %648 = vmatprep.subr.mxu0 0.0
    %649 = vmatpush2.msra.mxu0 0.0
    %650 = vmatprep.subr.mxu0 0.0
    %651 = vmatpush2.msra.mxu0 0.0
    %652 = vmatprep.mubr.f32.mxu0 0.0
    %653 = vmatmul.mubr.f32.gmra.mxu0 %v586
    %v654 = vpop.f32.mrf.mxu0
    %v655 = vadd.f32 0.0, %v654
    %v656 = vpop.f32.mrf.mxu0
    %657 = vdwg.mxu0
    %v658 = vadd.f32 %v584, %v655
    %v659 = vtanh.pop %v658
    %vm660 = vcmask 257024
    %661 = vst.msk [vmem:[#allocation2] sm:$0xf] %vm660, %v659
    // Predicated region
    $region26: #{tpu_custom_call.1} parent=1 // pred_check
      %p662 = pneg %p33
    $region27: #{tpu_custom_call.1} parent=1 // pred_check_branch
      %664 = sbr.rel (%p662) target = $region29
    $region28: #{tpu_custom_call.1} parent=1 // pred_region
      %v665 = vld [vmem:[%s2] sm:$0xff]
      %v666 = vld [vmem:[%s2 + $0x8] sm:$0xff]
      %v667 = vld [vmem:[%s2 + $0x10] sm:$0xff]
      %v668 = vld [vmem:[%s2 + $0x18] sm:$0xff]
      %v669 = vld [vmem:[#allocation3] sm:$0x1]
      %v671 = vlaneseq
      %v672 = vshrl.u32 %v671, 7
      %v673 = vsub.s32 0, %v672
      %v674 = vrot.slane %v669, %v673
      %v677 = vsel %vm45, %v659, 0
      %679 = vmatprep.subr.mxu0 0.0
      %680 = vmatpush1.msra.mxu0 0.0
      %681 = vmatprep.subr.mxu0 0.0
      %682 = vmatpush1.msra.mxu0 0.0
      %683 = vmatprep.subr.mxu0 0.0
      %684 = vmatpush1.msra.mxu0 0.0
      %685 = vmatprep.subr.mxu0 0.0
      %686 = vmatpush1.msra.mxu0 0.0
      %687 = vmatprep.subr.mxu0 0.0
      %688 = vmatpush1.msra.mxu0 0.0
      %689 = vmatprep.subr.mxu0 0.0
      %690 = vmatpush1.msra.mxu0 0.0
      %691 = vmatprep.subr.mxu0 0.0
      %692 = vmatpush1.msra.mxu0 0.0
      %693 = vmatprep.subr.mxu0 0.0
      %694 = vmatpush1.msra.mxu0 0.0
      %695 = vmatprep.subr.mxu0 0.0
      %696 = vmatpush1.msra.mxu0 0.0
      %697 = vmatprep.subr.mxu0 0.0
      %698 = vmatpush1.msra.mxu0 0.0
      %699 = vmatprep.subr.mxu0 0.0
      %700 = vmatpush1.msra.mxu0 0.0
      %701 = vmatprep.subr.mxu0 0.0
      %702 = vmatpush1.msra.mxu0 0.0
      %703 = vmatprep.subr.mxu0 0.0
      %704 = vmatpush1.msra.mxu0 %v668
      %705 = vmatprep.subr.mxu0 0.0
      %706 = vmatpush1.msra.mxu0 %v667
      %707 = vmatprep.subr.mxu0 0.0
      %708 = vmatpush1.msra.mxu0 %v666
      %709 = vmatprep.subr.mxu0 0.0
      %710 = vmatpush1.msra.mxu0 %v665
      %711 = vmatprep.subr.mxu0 0.0
      %712 = vmatpush2.msra.mxu0 0.0
      %713 = vmatprep.subr.mxu0 0.0
      %714 = vmatpush2.msra.mxu0 0.0
      %715 = vmatprep.subr.mxu0 0.0
      %716 = vmatpush2.msra.mxu0 0.0
      %717 = vmatprep.subr.mxu0 0.0
      %718 = vmatpush2.msra.mxu0 0.0
      %719 = vmatprep.subr.mxu0 0.0
      %720 = vmatpush2.msra.mxu0 0.0
      %721 = vmatprep.subr.mxu0 0.0
      %722 = vmatpush2.msra.mxu0 0.0
      %723 = vmatprep.subr.mxu0 0.0
      %724 = vmatpush2.msra.mxu0 0.0
      %725 = vmatprep.subr.mxu0 0.0
      %726 = vmatpush2.msra.mxu0 0.0
      %727 = vmatprep.subr.mxu0 0.0
      %728 = vmatpush2.msra.mxu0 0.0
      %729 = vmatprep.subr.mxu0 0.0
      %730 = vmatpush2.msra.mxu0 0.0
      %731 = vmatprep.subr.mxu0 0.0
      %732 = vmatpush2.msra.mxu0 0.0
      %733 = vmatprep.subr.mxu0 0.0
      %734 = vmatpush2.msra.mxu0 0.0
      %735 = vmatprep.subr.mxu0 0.0
      %736 = vmatpush2.msra.mxu0 0.0
      %737 = vmatprep.subr.mxu0 0.0
      %738 = vmatpush2.msra.mxu0 0.0
      %739 = vmatprep.subr.mxu0 0.0
      %740 = vmatpush2.msra.mxu0 0.0
      %741 = vmatprep.subr.mxu0 0.0
      %742 = vmatpush2.msra.mxu0 0.0
      %743 = vmatprep.mubr.f32.mxu0 0.0
      %744 = vmatmul.mubr.f32.gmra.mxu0 %v677
      %v745 = vpop.f32.mrf.mxu0
      %v746 = vadd.f32 %v674, %v745
      %v747 = vpop.f32.mrf.mxu0
      %748 = vdwg.mxu0
      %vm749 = vcmask 3072
      %750 = vst.msk [vmem:[%s4] sm:$0xf] %vm749, %v746
    $region29: #{tpu_custom_call.1} parent=1 // pred_fallthru
      _
    // Predicated region
    $region30: #{tpu_custom_call.1} parent=1 // pred_check
      _
    $region31: #{tpu_custom_call.1} parent=1 // pred_check_branch
      %752 = sbr.rel (0) target = $region33
    $region32: #{tpu_custom_call.1} parent=1 // pred_region
      _
    $region33: #{tpu_custom_call.1} parent=1 // pred_fallthru
      _
    // Predicated region
    $region34: #{tpu_custom_call.1} parent=1 // pred_check
      _
    $region35: #{tpu_custom_call.1} parent=1 // pred_check_branch
      %754 = sbr.rel (0) target = $region37
    $region36: #{tpu_custom_call.1} parent=1 // pred_region
      _
    $region37: #{tpu_custom_call.1} parent=1 // pred_fallthru
      _
    %755 = vsyncpa [#allocation5], 1

</llo_original>
